<compile_context>
chip_gen: v7x
topology: tpu7x:2x2x1
jax: 0.10.0
libtpu: 0.0.40
codegen_flags: <defaults>
</compile_context>

<pallas_src>
import jax
import jax.numpy as jnp
from jax.experimental import pallas as pl
from jax.experimental.pallas import tpu as pltpu

NUM_CLASSES = 20
SOFTMAX_EPS = 1e-5    # adf.Softmax forward default eps
LOSS_EPS = 1e-5       # SoftmaxHeteroscedasticLoss.forward eps
KEEP_VAR_EPS = 0.001  # keep_variance_fn


def _round_up(x, m):
    return ((x + m - 1) // m) * m


def _make_kernel(valid_l, tile_l, n_col_per_split, need_mask):
    def kernel(mean_ref, var_ref, label_ref, out_ref, acc_ref):
        j = pl.program_id(2)  # spatial-tile index within this split (reduction axis)

        @pl.when(j == 0)
        def _():
            acc_ref[...] = jnp.zeros_like(acc_ref)

        # (C, tile_l): classes on sublanes, spatial on lanes.  Upcast to f32 so
        # bf16 inputs (HBM-bandwidth win on v5e/v6e) still compute in f32.
        fm = mean_ref[...].astype(jnp.float32)
        fv = var_ref[...].astype(jnp.float32)
        C, T = fm.shape

        # --- adf.Softmax (log-normal approximation), reduction over class axis ---
        lg_mean = fm + 0.5 * fv
        # Per-column max-shift (clamped at 0) for f32 overflow safety.  The eps
        # term is exact when shift==0; when shift>0 the normalizer is >=1, so
        # using eps instead of eps*exp(-shift) perturbs out_mean by <=1e-5 rel.
        shift = jnp.maximum(jnp.max(lg_mean, axis=0, keepdims=True), 0.0)   # (1,T) XLU
        eg = jnp.exp(lg_mean - shift)
        constant = jnp.sum(eg, axis=0, keepdims=True) + SOFTMAX_EPS         # (1,T)
        inv_c = pl.reciprocal(constant, approx=True)                        # EUP vrcp
        inv_c = inv_c * (2.0 - constant * inv_c)                            # Newton (VALU)
        out_mean = eg * inv_c
        # lg_var / constant^2 == out_mean^2 * (exp(fv) - 1)  (shift-invariant);
        # keep_variance eps and loss eps folded into a single add.
        # NOTE: exp(fv)-1 matches the PyTorch module exactly; expm1 would be more
        # accurate for tiny variances but the +0.001 keep_variance floor makes
        # the cancellation immaterial.
        ov = out_mean * out_mean * (jnp.exp(fv) - 1.0) + (KEEP_VAR_EPS + LOSS_EPS)

        # --- one-hot targets over the class (sublane) axis, lane-dense labels ---
        lbl = label_ref[...]                                                # (1,T) int32
        cls = jax.lax.broadcasted_iota(jnp.int32, (C, T), 0)
        tgt = (lbl == cls).astype(jnp.float32)

        # --- heteroscedastic NLL term (0.5 factor applied once in the wrapper) ---
        precision = pl.reciprocal(ov, approx=True)                          # EUP vrcp
        precision = precision * (2.0 - ov * precision)                      # Newton (VALU)
        diff = tgt - out_mean
        term = precision * (diff * diff) + jnp.log(ov)

        # Class-reduce BEFORE accumulating: (1, tile_l) accumulator RMW instead
        # of (C, tile_l).
        col_term = jnp.sum(term, axis=0, keepdims=True)                     # (1,T) XLU

        if need_mask:  # static branch: only compiled when L % 128 != 0
            s = pl.program_id(1)
            base = (s * n_col_per_split + j) * tile_l
            col = base + jax.lax.broadcasted_iota(jnp.int32, (1, T), 1)
            col_term = jnp.where(col < valid_l, col_term, 0.0)

        acc_ref[...] += col_term

        @pl.when(j == pl.num_programs(2) - 1)
        def _():
            total = jnp.sum(acc_ref[...], axis=(0, 1), keepdims=True)       # (1,1)
            out_ref[...] = jnp.broadcast_to(total, out_ref.shape)           # lane-dense store

    return kernel


def softmax_heteroscedastic_loss(features_mean, features_variance, targets,
                                 tile_budget=16384):
    """features_mean/variance: [B, C, H, W] (NCHW); targets: [B, H, W] int."""
    B, C, H, W = features_mean.shape
    assert C == NUM_CLASSES
    L = H * W

    def as_float(x):
        # Preserve bf16 if the producer already emits it (HBM win); never insert
        # a standalone down-cast just for the kernel.
        return x if jnp.issubdtype(x.dtype, jnp.floating) else x.astype(jnp.float32)

    # Free reshapes only (contiguous NCHW -> (B, C, L)).  No jnp.pad of any input.
    fm = as_float(features_mean).reshape(B, C, L)
    fv = as_float(features_variance).reshape(B, C, L)
    lbl = targets.reshape(B, 1, L).astype(jnp.int32)

    # Adaptive lane tile: largest multiple of 128 that divides round_up(L,128)
    # and is <= tile_budget columns.  When L % 128 == 0 (common image sizes) the
    # tiles exactly cover the array -> no padding and no in-kernel mask at all.
    Lp = _round_up(L, 128)
    q = Lp // 128
    g_max = max(1, min(q, tile_budget // 128))
    g = next(d for d in range(g_max, 0, -1) if q % d == 0)
    tile_l = g * 128
    n_col_total = Lp // tile_l
    need_mask = Lp != L  # ragged tail handled via partial blocks + mask (no HBM pad pass)

    # Optional 2-way spatial split (extra parallel grid axis) so both v7x
    # TensorCores stay busy even when B is 1 or odd; neutral on v5e/v6e.
    n_split = 2 if (n_col_total % 2 == 0 and n_col_total >= 2) else 1
    n_col = n_col_total // n_split

    kernel = _make_kernel(L, tile_l, n_col, need_mask)

    partials = pl.pallas_call(
        kernel,
        # One lane-dense (1, 128) partial-sum row per (batch, split); all lanes equal.
        out_shape=jax.ShapeDtypeStruct((B, 1, n_split * 128), jnp.float32),
        grid_spec=pltpu.PrefetchScalarGridSpec(
            num_scalar_prefetch=0,
            grid=(B, n_split, n_col),
            in_specs=[
                pl.BlockSpec((pl.Squeezed(), C, tile_l),
                             lambda b, s, j: (b, 0, s * n_col + j)),
                pl.BlockSpec((pl.Squeezed(), C, tile_l),
                             lambda b, s, j: (b, 0, s * n_col + j)),
                pl.BlockSpec((pl.Squeezed(), 1, tile_l),
                             lambda b, s, j: (b, 0, s * n_col + j)),
            ],
            out_specs=pl.BlockSpec((pl.Squeezed(), 1, 128),
                                   lambda b, s, j: (b, 0, s)),
            scratch_shapes=[pltpu.VMEM((1, tile_l), jnp.float32)],
        ),
        # Batch & split axes "parallel" (megacore sharding on v7x); the spatial
        # axis carries the accumulator, so it stays "arbitrary" and innermost.
        compiler_params=pltpu.CompilerParams(
            dimension_semantics=("parallel", "parallel", "arbitrary"),
        ),
    )(fm, fv, lbl)

    # Each 128-lane group holds one identical partial sum; take lane 0 of each
    # group, sum, then apply the single 0.5 factor and the global mean.
    total = jnp.sum(partials[:, 0, ::128])
    return 0.5 * total / jnp.float32(B * C * H * W)


def _reference_loss(features_mean, features_variance, targets):
    """Pure-JAX reference mirroring the PyTorch module (silent sanity check)."""
    fm = features_mean.astype(jnp.float32)
    fv = features_variance.astype(jnp.float32)
    lg_mean = fm + 0.5 * fv
    eg = jnp.exp(lg_mean)
    lg_var = jnp.exp(2.0 * lg_mean) * (jnp.exp(fv) - 1.0)
    constant = jnp.sum(eg, axis=1, keepdims=True) + SOFTMAX_EPS
    mean = eg / constant
    var = lg_var / (constant ** 2) + KEEP_VAR_EPS
    tgt = jax.nn.one_hot(targets, NUM_CLASSES, dtype=jnp.float32)      # [B,H,W,C]
    tgt = jnp.transpose(tgt, (0, 3, 1, 2))                              # [B,C,H,W]
    precision = 1.0 / (var + LOSS_EPS)
    return jnp.mean(0.5 * precision * (tgt - mean) ** 2 + 0.5 * jnp.log(var + LOSS_EPS))


if __name__ == "__main__":
    B, C, H, W = 2, NUM_CLASSES, 16, 16
    key = jax.random.PRNGKey(0)
    k1, k2, k3 = jax.random.split(key, 3)

    features_mean = jax.random.normal(k1, (B, C, H, W), dtype=jnp.float32)
    # variances must be non-negative
    features_variance = jax.random.uniform(
        k2, (B, C, H, W), dtype=jnp.float32, minval=0.01, maxval=0.5
    )
    targets = jax.random.randint(k3, (B, H, W), 0, NUM_CLASSES, dtype=jnp.int32)

    loss = softmax_heteroscedastic_loss(features_mean, features_variance, targets)
    loss = jax.block_until_ready(loss)

    ref = jax.block_until_ready(_reference_loss(features_mean, features_variance, targets))
    # Newton-refined reciprocals keep the kernel near exact-f32 accuracy.
    assert jnp.allclose(loss, ref, rtol=2e-3, atol=2e-3), (loss, ref)

    print("KERNEL_OK")
</pallas_src>

<mosaic_0001>
module attributes {stable_mosaic.version = 11 : i64} {
  func.func @kernel(%arg0: i32, %arg1: i32, %arg2: i32, %arg3: memref<1x20x256xf32, #tpu.memory_space<vmem>>, %arg4: memref<1x20x256xf32, #tpu.memory_space<vmem>>, %arg5: memref<1x1x256xi32, #tpu.memory_space<vmem>>, %arg6: memref<1x1x128xf32, #tpu.memory_space<vmem>>, %arg7: memref<1x256xf32, #tpu.memory_space<vmem>>) attributes {dimension_semantics = [#tpu.dimension_semantics<parallel>, #tpu.dimension_semantics<parallel>, #tpu.dimension_semantics<arbitrary>], iteration_bounds = array<i64: 2, 1, 1>, scalar_prefetch = 0 : i64, scratch_operands = 1 : i64, tpu.core_type = #tpu.core_type<tc>, window_params = [{transform_indices = @transform_0, window_bounds = array<i64: 1, 20, 256>}, {transform_indices = @transform_1, window_bounds = array<i64: 1, 20, 256>}, {transform_indices = @transform_2, window_bounds = array<i64: 1, 1, 256>}, {transform_indices = @transform_3, window_bounds = array<i64: 1, 1, 128>}]} {
    %c0_i32 = arith.constant 0 : i32
    %0 = arith.cmpi eq, %arg2, %c0_i32 : i32
    %1 = arith.extui %0 : i1 to i32
    %c0_i32_0 = arith.constant 0 : i32
    %2 = arith.cmpi ne, %1, %c0_i32_0 : i32
    scf.if %2 {
      %cst_24 = arith.constant 0.000000e+00 : f32
      %60 = vector.broadcast %cst_24 : f32 to vector<1x256xf32>
      %c0_25 = arith.constant 0 : index
      %c0_26 = arith.constant 0 : index
      %61 = vector.load %arg7[%c0_25, %c0_26] : memref<1x256xf32, #tpu.memory_space<vmem>>, vector<1x256xf32>
      tpu.vector_store %arg7[%c0_25, %c0_26], %60 {strides = array<i32>} : memref<1x256xf32, #tpu.memory_space<vmem>>, vector<1x256xf32>,
    } else {
    }
    %c0 = arith.constant 0 : index
    %c0_1 = arith.constant 0 : index
    %c0_2 = arith.constant 0 : index
    %3 = vector.load %arg3[%c0, %c0_1, %c0_2] : memref<1x20x256xf32, #tpu.memory_space<vmem>>, vector<1x20x256xf32>
    %4 = vector.shape_cast %3 : vector<1x20x256xf32> to vector<20x256xf32>
    %c0_3 = arith.constant 0 : index
    %c0_4 = arith.constant 0 : index
    %c0_5 = arith.constant 0 : index
    %5 = vector.load %arg4[%c0_3, %c0_4, %c0_5] : memref<1x20x256xf32, #tpu.memory_space<vmem>>, vector<1x20x256xf32>
    %6 = vector.shape_cast %5 : vector<1x20x256xf32> to vector<20x256xf32>
    %cst = arith.constant 5.000000e-01 : f32
    %7 = vector.broadcast %cst : f32 to vector<20x256xf32>
    %8 = arith.mulf %7, %6 : vector<20x256xf32>
    %9 = arith.addf %4, %8 : vector<20x256xf32>
    %cst_6 = arith.constant dense<0xFF800000> : vector<256xf32>
    %10 = vector.multi_reduction <maximumf>, %9, %cst_6 [0] : vector<20x256xf32> to vector<256xf32>
    %11 = vector.shape_cast %10 : vector<256xf32> to vector<1x256xf32>
    %cst_7 = arith.constant 0.000000e+00 : f32
    %12 = vector.broadcast %cst_7 : f32 to vector<1x256xf32>
    %13 = arith.maximumf %11, %12 : vector<1x256xf32>
    %14 = vector.broadcast %13 : vector<1x256xf32> to vector<20x256xf32>
    %15 = arith.subf %9, %14 : vector<20x256xf32>
    %16 = math.exp %15 : vector<20x256xf32>
    %cst_8 = arith.constant dense<0.000000e+00> : vector<256xf32>
    %17 = vector.multi_reduction <add>, %16, %cst_8 [0] : vector<20x256xf32> to vector<256xf32>
    %18 = vector.shape_cast %17 : vector<256xf32> to vector<1x256xf32>
    %cst_9 = arith.constant 9.99999974E-6 : f32
    %19 = vector.broadcast %cst_9 : f32 to vector<1x256xf32>
    %20 = arith.addf %18, %19 : vector<1x256xf32>
    %21 = tpu.reciprocal %20 {approx = true} : vector<1x256xf32> -> vector<1x256xf32>
    %22 = arith.mulf %20, %21 : vector<1x256xf32>
    %cst_10 = arith.constant 2.000000e+00 : f32
    %23 = vector.broadcast %cst_10 : f32 to vector<1x256xf32>
    %24 = arith.subf %23, %22 : vector<1x256xf32>
    %25 = arith.mulf %21, %24 : vector<1x256xf32>
    %26 = vector.broadcast %25 : vector<1x256xf32> to vector<20x256xf32>
    %27 = arith.mulf %16, %26 : vector<20x256xf32>
    %28 = arith.mulf %27, %27 : vector<20x256xf32>
    %29 = math.exp %6 : vector<20x256xf32>
    %cst_11 = arith.constant 1.000000e+00 : f32
    %30 = vector.broadcast %cst_11 : f32 to vector<20x256xf32>
    %31 = arith.subf %29, %30 : vector<20x256xf32>
    %32 = arith.mulf %28, %31 : vector<20x256xf32>
    %cst_12 = arith.constant 1.010000e-03 : f32
    %33 = vector.broadcast %cst_12 : f32 to vector<20x256xf32>
    %34 = arith.addf %32, %33 : vector<20x256xf32>
    %c0_13 = arith.constant 0 : index
    %c0_14 = arith.constant 0 : index
    %c0_15 = arith.constant 0 : index
    %35 = vector.load %arg5[%c0_13, %c0_14, %c0_15] : memref<1x1x256xi32, #tpu.memory_space<vmem>>, vector<1x1x256xi32>
    %36 = vector.shape_cast %35 : vector<1x1x256xi32> to vector<1x256xi32>
    %37 = tpu.iota {dimensions = array<i32: 0>} : vector<20x256xi32>
    %38 = vector.broadcast %36 : vector<1x256xi32> to vector<20x256xi32>
    %39 = arith.cmpi eq, %38, %37 : vector<20x256xi32>
    %40 = arith.extui %39 : vector<20x256xi1> to vector<20x256xi32>
    %41 = arith.sitofp %40 : vector<20x256xi32> to vector<20x256xf32>
    %42 = tpu.reciprocal %34 {approx = true} : vector<20x256xf32> -> vector<20x256xf32>
    %43 = arith.mulf %34, %42 : vector<20x256xf32>
    %cst_16 = arith.constant 2.000000e+00 : f32
    %44 = vector.broadcast %cst_16 : f32 to vector<20x256xf32>
    %45 = arith.subf %44, %43 : vector<20x256xf32>
    %46 = arith.mulf %42, %45 : vector<20x256xf32>
    %47 = arith.subf %41, %27 : vector<20x256xf32>
    %48 = arith.mulf %47, %47 : vector<20x256xf32>
    %49 = arith.mulf %46, %48 : vector<20x256xf32>
    %50 = math.log %34 : vector<20x256xf32>
    %51 = arith.addf %49, %50 : vector<20x256xf32>
    %cst_17 = arith.constant dense<0.000000e+00> : vector<256xf32>
    %52 = vector.multi_reduction <add>, %51, %cst_17 [0] : vector<20x256xf32> to vector<256xf32>
    %53 = vector.shape_cast %52 : vector<256xf32> to vector<1x256xf32>
    %c0_18 = arith.constant 0 : index
    %c0_19 = arith.constant 0 : index
    %54 = vector.load %arg7[%c0_18, %c0_19] : memref<1x256xf32, #tpu.memory_space<vmem>>, vector<1x256xf32>
    %55 = arith.addf %54, %53 : vector<1x256xf32>
    %c0_20 = arith.constant 0 : index
    %c0_21 = arith.constant 0 : index
    %56 = vector.load %arg7[%c0_20, %c0_21] : memref<1x256xf32, #tpu.memory_space<vmem>>, vector<1x256xf32>
    tpu.vector_store %arg7[%c0_20, %c0_21], %55 {strides = array<i32>} : memref<1x256xf32, #tpu.memory_space<vmem>>, vector<1x256xf32>,
    %c0_i32_22 = arith.constant 0 : i32
    %57 = arith.cmpi eq, %arg2, %c0_i32_22 : i32
    %58 = arith.extui %57 : i1 to i32
    %c0_i32_23 = arith.constant 0 : i32
    %59 = arith.cmpi ne, %58, %c0_i32_23 : i32
    scf.if %59 {
      %c0_24 = arith.constant 0 : index
      %c0_25 = arith.constant 0 : index
      %60 = vector.load %arg7[%c0_24, %c0_25] : memref<1x256xf32, #tpu.memory_space<vmem>>, vector<1x256xf32>
      %61 = vector.shape_cast %60 : vector<1x256xf32> to vector<1x1x256xf32>
      %cst_26 = arith.constant dense<0.000000e+00> : vector<1xf32>
      %62 = vector.multi_reduction <add>, %61, %cst_26 [1, 2] : vector<1x1x256xf32> to vector<1xf32>
      %63 = vector.shape_cast %62 : vector<1xf32> to vector<1x1x1xf32>
      %64 = vector.extract %63[0, 0, 0] : f32 from vector<1x1x1xf32>
      %65 = vector.broadcast %64 : f32 to vector<1x1xf32>
      %66 = vector.shape_cast %65 : vector<1x1xf32> to vector<1x1xf32>
      %67 = vector.broadcast %66 : vector<1x1xf32> to vector<1x128xf32>
      %c0_27 = arith.constant 0 : index
      %c0_28 = arith.constant 0 : index
      %c0_29 = arith.constant 0 : index
      %68 = vector.load %arg6[%c0_27, %c0_28, %c0_29] : memref<1x1x128xf32, #tpu.memory_space<vmem>>, vector<1x1x128xf32>
      %69 = vector.shape_cast %68 : vector<1x1x128xf32> to vector<1x128xf32>
      %70 = vector.shape_cast %67 : vector<1x128xf32> to vector<1x1x128xf32>
      tpu.vector_store %arg6[%c0_27, %c0_28, %c0_29], %70 {strides = array<i32>} : memref<1x1x128xf32, #tpu.memory_space<vmem>>, vector<1x1x128xf32>,
    } else {
    }
    return
  }
  func.func @transform_0(%arg0: i32, %arg1: i32, %arg2: i32) -> (i32, i32, i32) {
    %c1_i32 = arith.constant 1 : i32
    %0 = arith.muli %arg1, %c1_i32 : i32
    %1 = arith.addi %0, %arg2 : i32
    %c0_i32 = arith.constant 0 : i32
    %c0_i32_0 = arith.constant 0 : i32
    return %arg0, %c0_i32, %1 : i32, i32, i32
  }
  func.func @transform_1(%arg0: i32, %arg1: i32, %arg2: i32) -> (i32, i32, i32) {
    %c1_i32 = arith.constant 1 : i32
    %0 = arith.muli %arg1, %c1_i32 : i32
    %1 = arith.addi %0, %arg2 : i32
    %c0_i32 = arith.constant 0 : i32
    %c0_i32_0 = arith.constant 0 : i32
    return %arg0, %c0_i32, %1 : i32, i32, i32
  }
  func.func @transform_2(%arg0: i32, %arg1: i32, %arg2: i32) -> (i32, i32, i32) {
    %c1_i32 = arith.constant 1 : i32
    %0 = arith.muli %arg1, %c1_i32 : i32
    %1 = arith.addi %0, %arg2 : i32
    %c0_i32 = arith.constant 0 : i32
    %c0_i32_0 = arith.constant 0 : i32
    return %arg0, %c0_i32, %1 : i32, i32, i32
  }
  func.func @transform_3(%arg0: i32, %arg1: i32, %arg2: i32) -> (i32, i32, i32) {
    %c0_i32 = arith.constant 0 : i32
    %c0_i32_0 = arith.constant 0 : i32
    return %arg0, %c0_i32, %arg1 : i32, i32, i32
  }
}

</mosaic_0001>

<llo_original>
// kernel: tpu_custom_call.1
$region0: #{tpu_custom_call.1}
  #allocation0 [shape = 'u32[]', space=smem, size = 0x4, offset = 0x4, fixed_abs, tag = 'smem constant byte address 0x4 - core index']
  #allocation1 [shape = 'u32[144,128]{1,0:T(1,128)}', space=vmem, size = 0x12000, scoped, tag = 'internal scratch']
  #allocation2 [shape = 'f32[1,256]{1,0:T(1,128)}', space=vmem, size = 0x400, scoped, tag = 'scratch operand']
  %s0 = inlined_call_operand.vmem [shape: f32[2,20,256], index: 0, kind: input, shape index: {}]
  %s1 = inlined_call_operand.vmem [shape: f32[2,20,256], index: 1, kind: input, shape index: {}]
  %s2 = inlined_call_operand.vmem [shape: s32[2,1,256], index: 2, kind: input, shape index: {}]
  %s3 = inlined_call_operand.hbm [shape: f32[2,1,128], index: 3, kind: output, shape index: {}]
  %s4 = sld [smem:[#allocation0]]
  $region53: #{tpu_custom_call.1} parent=0
    _
  %s6 = ssub.s32 1, %s4
  %s7 = scalar_select 0, %s6, %s4
  $region1: #{tpu_custom_call.1} parent=0
    #allocation3 [shape = 'u8[1024]{0}', space=vmem, size = 0x400, scoped, tag = 'output window, operand 0']
    #allocation4 [shape = 's32[2]{0}', space=sflag, size = 0x8, scoped, tag = 'scoped memory for tpu_custom_call.1']
    %8 = vsyncpa [#allocation4], 0
    %s9 = scalar_lea.sflag [#allocation4], 1
    %10 = vsyncpa %s9, 0
    loop: start=0, step=1, limit=4
    $region2: #{tpu_custom_call.1} parent=1 // loop_pre_header
      _
    $region3: #{tpu_custom_call.1} parent=1 // loop_header
      %s12 = sphi 0, %s16
      %p13 = scmp.ge.s32.totalorder %s12, 4
      %s19 = sphi 0, %s38
      %s20 = sphi 0, %s34
      %s21 = sphi 0, %s30
      %s22 = sphi 0, %s19
      %s23 = sphi 0, %s20
      %s24 = sphi 0, %s21
      %s25 = sphi 0, %s22
      %s26 = sphi 0, %s23
      %s27 = sphi 0, %s24
      %s45 = sphi 0, %s47
      %s48 = sphi 0, %s45
      %s49 = sphi 0, %s48
      %s65 = sphi 0, %s49
      %s75 = sphi 0, %s77
      %s78 = sphi 0, %s75
      %s79 = sphi 0, %s78
      %s95 = sphi 0, %s79
      %s105 = sphi 0, %s107
      %s108 = sphi 0, %s105
      %s109 = sphi 0, %s108
      %s125 = sphi 0, %s109
      %s133 = sphi 0, %s135
      %s136 = sphi 0, %s133
      %s137 = sphi 0, %s136
      %s153 = sphi 0, %s137
    $region4: #{tpu_custom_call.1} parent=1 // loop_header_branch
      %15 = sbr.rel (%p13) target = $region8
    $region5: #{tpu_custom_call.1} parent=1 // loop_body
      %s17 = ssub.s32 %s12, 1
      %s18 = ssub.s32 %s12, 2
      %s28 = sadd.s32 1, %s21
      %p29 = scmp.ge.s32.totalorder %s28, 1
      %s30 = scalar_select %p29, 0, %s28
      %s31 = sadd.s32 1, %s20
      %s32 = scalar_select %p29, %s31, %s20
      %p33 = scmp.ge.s32.totalorder %s32, 1
      %s34 = scalar_select %p33, 0, %s32
      %s35 = sadd.s32 1, %s19
      %s36 = scalar_select %p33, %s35, %s19
      %p37 = scmp.ge.s32.totalorder %s36, 2
      %s38 = scalar_select %p37, 0, %s36
      %s39 = sadd.s32 %s20, %s21
      %s40 = sadd.s32 %s34, %s30
      %s41 = ssub.s32 %s19, %s38
      %s42 = ssub.s32 %s39, %s40
      %s43 = sor.u32 %s41, %s42
      %p44 = scmp.eq.s32.totalorder %s43, 0
      %s46 = sadd.s32 %s45, 1
      %s47 = scalar_select %p44, %s45, %s46
      %p50 = pneg %p44
      %p51 = scmp.eq.s32.totalorder %s12, 1
      %p52 = por %p50, %p51
      %p53 = scmp.ne.s32.totalorder %s45, %s48
      %p54 = scmp.eq.s32.totalorder %s12, 0
      %p55 = por %p53, %p54
      %p56 = scmp.ne.s32.totalorder %s45, %s48
      %p57 = scmp.eq.s32.totalorder %s17, 1
      %p58 = por %p56, %p57
      %p59 = scmp.ne.s32.totalorder %s48, %s49
      %p60 = scmp.eq.s32.totalorder %s17, 0
      %p61 = por %p59, %p60
      %p62 = scmp.ne.s32.totalorder %s48, %s49
      %p63 = scmp.eq.s32.totalorder %s18, 1
      %p64 = por %p62, %p63
      %p66 = scmp.ne.s32.totalorder %s49, %s65
      %p67 = scmp.eq.s32.totalorder %s18, 0
      %p68 = por %p66, %p67
      %s69 = sadd.s32 %s20, %s21
      %s70 = sadd.s32 %s34, %s30
      %s71 = ssub.s32 %s19, %s38
      %s72 = ssub.s32 %s69, %s70
      %s73 = sor.u32 %s71, %s72
      %p74 = scmp.eq.s32.totalorder %s73, 0
      %s76 = sadd.s32 %s75, 1
      %s77 = scalar_select %p74, %s75, %s76
      %p80 = pneg %p74
      %p81 = scmp.eq.s32.totalorder %s12, 1
      %p82 = por %p80, %p81
      %p83 = scmp.ne.s32.totalorder %s75, %s78
      %p84 = scmp.eq.s32.totalorder %s12, 0
      %p85 = por %p83, %p84
      %p86 = scmp.ne.s32.totalorder %s75, %s78
      %p87 = scmp.eq.s32.totalorder %s17, 1
      %p88 = por %p86, %p87
      %p89 = scmp.ne.s32.totalorder %s78, %s79
      %p90 = scmp.eq.s32.totalorder %s17, 0
      %p91 = por %p89, %p90
      %p92 = scmp.ne.s32.totalorder %s78, %s79
      %p93 = scmp.eq.s32.totalorder %s18, 1
      %p94 = por %p92, %p93
      %p96 = scmp.ne.s32.totalorder %s79, %s95
      %p97 = scmp.eq.s32.totalorder %s18, 0
      %p98 = por %p96, %p97
      %s99 = sadd.s32 %s20, %s21
      %s100 = sadd.s32 %s34, %s30
      %s101 = ssub.s32 %s19, %s38
      %s102 = ssub.s32 %s99, %s100
      %s103 = sor.u32 %s101, %s102
      %p104 = scmp.eq.s32.totalorder %s103, 0
      %s106 = sadd.s32 %s105, 1
      %s107 = scalar_select %p104, %s105, %s106
      %p110 = pneg %p104
      %p111 = scmp.eq.s32.totalorder %s12, 1
      %p112 = por %p110, %p111
      %p113 = scmp.ne.s32.totalorder %s105, %s108
      %p114 = scmp.eq.s32.totalorder %s12, 0
      %p115 = por %p113, %p114
      %p116 = scmp.ne.s32.totalorder %s105, %s108
      %p117 = scmp.eq.s32.totalorder %s17, 1
      %p118 = por %p116, %p117
      %p119 = scmp.ne.s32.totalorder %s108, %s109
      %p120 = scmp.eq.s32.totalorder %s17, 0
      %p121 = por %p119, %p120
      %p122 = scmp.ne.s32.totalorder %s108, %s109
      %p123 = scmp.eq.s32.totalorder %s18, 1
      %p124 = por %p122, %p123
      %p126 = scmp.ne.s32.totalorder %s109, %s125
      %p127 = scmp.eq.s32.totalorder %s18, 0
      %p128 = por %p126, %p127
      %s129 = ssub.s32 %s19, %s38
      %s130 = ssub.s32 %s20, %s34
      %s131 = sor.u32 %s129, %s130
      %p132 = scmp.eq.s32.totalorder %s131, 0
      %s134 = sadd.s32 %s133, 1
      %s135 = scalar_select %p132, %s133, %s134
      %p138 = pneg %p132
      %p139 = scmp.eq.s32.totalorder %s12, 1
      %p140 = por %p138, %p139
      %p141 = scmp.ne.s32.totalorder %s133, %s136
      %p142 = scmp.eq.s32.totalorder %s12, 0
      %p143 = por %p141, %p142
      %p144 = scmp.ne.s32.totalorder %s133, %s136
      %p145 = scmp.eq.s32.totalorder %s17, 1
      %p146 = por %p144, %p145
      %p147 = scmp.ne.s32.totalorder %s136, %s137
      %p148 = scmp.eq.s32.totalorder %s17, 0
      %p149 = por %p147, %p148
      %p150 = scmp.ne.s32.totalorder %s136, %s137
      %p151 = scmp.eq.s32.totalorder %s18, 1
      %p152 = por %p150, %p151
      %p154 = scmp.ne.s32.totalorder %s137, %s153
      %p155 = scmp.eq.s32.totalorder %s18, 0
      %p156 = por %p154, %p155
      %p157 = scmp.le.s32.totalorder 1, %s12
      %p158 = scmp.lt.s32.totalorder %s12, 3
      %p159 = pnand %p157, %p158
      %p160 = pneg %p159
      // Predicated region
      $region9: #{tpu_custom_call.1} parent=5 // pred_check
        _
      $region10: #{tpu_custom_call.1} parent=5 // pred_check_branch
        %162 = sbr.rel (%p159) target = $region12
      $region11: #{tpu_custom_call.1} parent=5 // pred_region
        %s163 = ssub.s32 %s12, 1
      $region12: #{tpu_custom_call.1} parent=5 // pred_fallthru
        _
      %p164 = scmp.lt.s32.totalorder %s12, 2
      // Predicated region
      $region13: #{tpu_custom_call.1} parent=5 // pred_check
        %p165 = pneg %p164
      $region14: #{tpu_custom_call.1} parent=5 // pred_check_branch
        %167 = sbr.rel (%p165) target = $region16
      $region15: #{tpu_custom_call.1} parent=5 // pred_region
        // Predicated region
        $region17: #{tpu_custom_call.1} parent=15 // pred_check
          %p168 = pneg %p55
        $region18: #{tpu_custom_call.1} parent=15 // pred_check_branch
          %170 = sbr.rel (%p168) target = $region20
        $region19: #{tpu_custom_call.1} parent=15 // pred_region
          %s171 = sadd.s32 %s20, %s21
          %s172 = smul.u32 2, %s171
          %p173 = scmp.lt.s32.totalorder %s19, 1
          %s174 = scalar_select %p173, %s19, 1
          %p175 = scmp.lt.s32.totalorder %s172, 1
          %s176 = scalar_select %p175, %s172, 1
          %s177 = smul.addr %s174, 6
          %s178 = sadd.s32 %s176, %s177
          %s179 = smul.addr %s178, 8
          %s180 = scalar_lea.vmem %s0, %s179
          %s181 = sadd.s32 %s20, %s21
          %s182 = smul.u32 2, %s181
        $region20: #{tpu_custom_call.1} parent=15 // pred_fallthru
          _
        // Predicated region
        $region21: #{tpu_custom_call.1} parent=15 // pred_check
          %p183 = pneg %p85
        $region22: #{tpu_custom_call.1} parent=15 // pred_check_branch
          %185 = sbr.rel (%p183) target = $region24
        $region23: #{tpu_custom_call.1} parent=15 // pred_region
          %s186 = sadd.s32 %s20, %s21
          %s187 = smul.u32 2, %s186
          %p188 = scmp.lt.s32.totalorder %s19, 1
          %s189 = scalar_select %p188, %s19, 1
          %p190 = scmp.lt.s32.totalorder %s187, 1
          %s191 = scalar_select %p190, %s187, 1
          %s192 = smul.addr %s189, 6
          %s193 = sadd.s32 %s191, %s192
          %s194 = smul.addr %s193, 8
          %s195 = scalar_lea.vmem %s1, %s194
          %s196 = sadd.s32 %s20, %s21
          %s197 = smul.u32 2, %s196
        $region24: #{tpu_custom_call.1} parent=15 // pred_fallthru
          _
        // Predicated region
        $region25: #{tpu_custom_call.1} parent=15 // pred_check
          %p198 = pneg %p115
        $region26: #{tpu_custom_call.1} parent=15 // pred_check_branch
          %200 = sbr.rel (%p198) target = $region28
        $region27: #{tpu_custom_call.1} parent=15 // pred_region
          %s201 = sadd.s32 %s20, %s21
          %s202 = smul.u32 2, %s201
          %p203 = scmp.lt.s32.totalorder %s19, 1
          %s204 = scalar_select %p203, %s19, 1
          %p205 = scmp.lt.s32.totalorder %s202, 1
          %s206 = scalar_select %p205, %s202, 1
          %s207 = smul.addr %s204, 2
          %s208 = sadd.s32 %s206, %s207
          %s209 = scalar_lea.vmem %s2, %s208
          %s210 = sadd.s32 %s20, %s21
          %s211 = smul.u32 2, %s210
        $region28: #{tpu_custom_call.1} parent=15 // pred_fallthru
          _
      $region16: #{tpu_custom_call.1} parent=5 // pred_fallthru
        _
      %p212 = scmp.le.s32.totalorder 1, %s12
      %p213 = scmp.lt.s32.totalorder %s12, 3
      %p214 = pnand %p212, %p213
      %p215 = pneg %p214
      // Predicated region
      $region29: #{tpu_custom_call.1} parent=5 // pred_check
        _
      $region30: #{tpu_custom_call.1} parent=5 // pred_check_branch
        %217 = sbr.rel (%p214) target = $region32
      $region31: #{tpu_custom_call.1} parent=5 // pred_region
        %s218 = ssub.s32 %s12, 1
        %s219 = sadd.s32 %s23, %s24
        %s220 = smul.u32 2, %s219
        %p221 = scmp.lt.s32.totalorder %s22, 1
        %s222 = scalar_select %p221, %s22, 1
        %p223 = scmp.lt.s32.totalorder %s220, 1
        %s224 = scalar_select %p223, %s220, 1
        %s225 = smul.addr %s222, 6
        %s226 = sadd.s32 %s224, %s225
        %s227 = smul.addr %s226, 8
        %s228 = scalar_lea.vmem %s0, %s227
        %p229 = pneg %p61
        %p230 = pneg %p58
        %s231 = sadd.s32 %s23, %s24
        %s232 = smul.u32 2, %s231
        %p233 = scmp.lt.s32.totalorder %s22, 1
        %s234 = scalar_select %p233, %s22, 1
        %p235 = scmp.lt.s32.totalorder %s232, 1
        %s236 = scalar_select %p235, %s232, 1
        %s237 = smul.addr %s234, 6
        %s238 = sadd.s32 %s236, %s237
        %s239 = smul.addr %s238, 8
        %s240 = scalar_lea.vmem %s1, %s239
        %p241 = pneg %p91
        %p242 = pneg %p88
        %s243 = sadd.s32 %s23, %s24
        %s244 = smul.u32 2, %s243
        %p245 = scmp.lt.s32.totalorder %s22, 1
        %s246 = scalar_select %p245, %s22, 1
        %p247 = scmp.lt.s32.totalorder %s244, 1
        %s248 = scalar_select %p247, %s244, 1
        %s249 = smul.addr %s246, 2
        %s250 = sadd.s32 %s248, %s249
        %s251 = scalar_lea.vmem %s2, %s250
        %p252 = pneg %p121
        %p253 = pneg %p118
        %p254 = pneg %p149
        %p255 = pneg %p146
        %s256 = sand.u32 %s136, 1
        %s257 = scalar_lea.sflag [#allocation4], %s256
        %s258 = sand.u32 %s136, 1
        %s259 = scalar_lea.vmem [#allocation3], %s258
        %s260 = sadd.s32 %s23, %s24
        %s261 = smul.u32 2, %s260
        %p262 = scmp.lt.s32.totalorder %s22, 1
        %s263 = scalar_select %p262, %s22, 1
        %p264 = scmp.lt.s32.totalorder %s261, 1
        %s265 = scalar_select %p264, %s261, 1
        %s266 = smul.addr %s263, 6
        %s267 = sadd.s32 %s265, %s266
        %s268 = smul.addr %s267, 8
        %s269 = scalar_lea.vmem %s0, %s268
        %s270 = sadd.s32 %s23, %s24
        %s271 = smul.u32 2, %s270
        %s272 = sadd.s32 %s23, %s24
        %s273 = smul.u32 2, %s272
        %p274 = scmp.lt.s32.totalorder %s22, 1
        %s275 = scalar_select %p274, %s22, 1
        %p276 = scmp.lt.s32.totalorder %s273, 1
        %s277 = scalar_select %p276, %s273, 1
        %s278 = smul.addr %s275, 6
        %s279 = sadd.s32 %s277, %s278
        %s280 = smul.addr %s279, 8
        %s281 = scalar_lea.vmem %s1, %s280
        %s282 = sadd.s32 %s23, %s24
        %s283 = smul.u32 2, %s282
        %s284 = sadd.s32 %s23, %s24
        %s285 = smul.u32 2, %s284
        %p286 = scmp.lt.s32.totalorder %s22, 1
        %s287 = scalar_select %p286, %s22, 1
        %p288 = scmp.lt.s32.totalorder %s285, 1
        %s289 = scalar_select %p288, %s285, 1
        %s290 = smul.addr %s287, 2
        %s291 = sadd.s32 %s289, %s290
        %s292 = scalar_lea.vmem %s2, %s291
        %s293 = sadd.s32 %s23, %s24
        %s294 = smul.u32 2, %s293
        %p295 = scmp.eq.s32.totalorder %s24, 0
        // Predicated region
        $region33: #{tpu_custom_call.1} parent=31 // pred_check
          %p296 = pneg %p295
        $region34: #{tpu_custom_call.1} parent=31 // pred_check_branch
          %298 = sbr.rel (%p296) target = $region36
        $region35: #{tpu_custom_call.1} parent=31 // pred_region
          %v299 = vlaneseq
          %vm300 = vcmp.ge.s32.totalorder %v299, 0
          %vm301 = vcmp.lt.s32.totalorder %v299, 256
          %vm302 = vmand %vm300, %vm301
          %303 = vst.msk [vmem:[#allocation2] sm:$0x3] %vm302, 0.0
        $region36: #{tpu_custom_call.1} parent=31 // pred_fallthru
          _
        %v304 = vld [vmem:[%s269] sm:$0xff]
        %v305 = vld [vmem:[%s269 + $0x8] sm:$0xff]
        %v306 = vld [vmem:[%s269 + $0x10] sm:$0xff]
        %v307 = vld [vmem:[%s269 + $0x18] sm:$0xff]
        %v308 = vld [vmem:[%s269 + $0x20] sm:$0xf]
        %v309 = vld [vmem:[%s269 + $0x28] sm:$0xf]
        %v310 = vld [vmem:[%s281] sm:$0xff]
        %v311 = vld [vmem:[%s281 + $0x8] sm:$0xff]
        %v312 = vld [vmem:[%s281 + $0x10] sm:$0xff]
        %v313 = vld [vmem:[%s281 + $0x18] sm:$0xff]
        %v314 = vld [vmem:[%s281 + $0x20] sm:$0xf]
        %v315 = vld [vmem:[%s281 + $0x28] sm:$0xf]
        %v316 = vmul.f32 %v310, 0.5
        %v317 = vmul.f32 %v311, 0.5
        %v318 = vmul.f32 %v312, 0.5
        %v319 = vmul.f32 %v313, 0.5
        %v320 = vmul.f32 %v314, 0.5
        %v321 = vmul.f32 %v315, 0.5
        %v322 = vadd.f32 %v304, %v316
        %v323 = vadd.f32 %v305, %v317
        %v324 = vadd.f32 %v306, %v318
        %v325 = vadd.f32 %v307, %v319
        %v326 = vadd.f32 %v308, %v320
        %v327 = vadd.f32 %v309, %v321
        %vm328 = vcmask 1043456
        %v329 = vsel %vm328, %v326, -inf
        %v330 = vmax.f32 %v322, %v329
        %v331 = vmax.f32 %v330, %v324
        %v332 = vrot.slane %v331, 4
        %v333 = vmax.f32 %v331, %v332
        %v334 = vrot.slane %v333, 2
        %v335 = vmax.f32 %v333, %v334
        %v336 = vrot.slane %v335, 1
        %v337 = vmax.f32 %v335, %v336
        %v338 = vsel %vm328, %v327, -inf
        %v339 = vmax.f32 %v323, %v338
        %v340 = vmax.f32 %v339, %v325
        %v341 = vrot.slane %v340, 4
        %v342 = vmax.f32 %v340, %v341
        %v343 = vrot.slane %v342, 2
        %v344 = vmax.f32 %v342, %v343
        %v345 = vrot.slane %v344, 1
        %v346 = vmax.f32 %v344, %v345
        %v347 = vmax.f32 %v337, 0.0
        %v348 = vmax.f32 %v346, 0.0
        %v349 = vsub.f32 %v322, %v347
        %v350 = vsub.f32 %v323, %v348
        %v351 = vsub.f32 %v324, %v347
        %v352 = vsub.f32 %v325, %v348
        %v353 = vsub.f32 %v326, %v347
        %v354 = vsub.f32 %v327, %v348
        %v355 = vmul.f32 %v349, 1.442695
        %v356 = vpow.pop %v355
        %v357 = vmul.f32 %v350, 1.442695
        %v358 = vpow.pop %v357
        %v359 = vmul.f32 %v351, 1.442695
        %v360 = vpow.pop %v359
        %v361 = vmul.f32 %v352, 1.442695
        %v362 = vpow.pop %v361
        %v363 = vmul.f32 %v353, 1.442695
        %v364 = vpow.pop %v363
        %v365 = vmul.f32 %v354, 1.442695
        %v366 = vpow.pop %v365
        %v367 = vadd.f32 %v356, %v360
        %v368 = vsel %vm328, %v364, 0.0
        %v369 = vadd.f32 %v367, %v368
        %v370 = vrot.slane %v369, 4
        %v371 = vadd.f32 %v369, %v370
        %v372 = vrot.slane %v371, 2
        %v373 = vadd.f32 %v371, %v372
        %v374 = vrot.slane %v373, 1
        %v375 = vadd.f32 %v373, %v374
        %v376 = vadd.f32 %v358, %v362
        %v377 = vsel %vm328, %v366, 0.0
        %v378 = vadd.f32 %v376, %v377
        %v379 = vrot.slane %v378, 4
        %v380 = vadd.f32 %v378, %v379
        %v381 = vrot.slane %v380, 2
        %v382 = vadd.f32 %v380, %v381
        %v383 = vrot.slane %v382, 1
        %v384 = vadd.f32 %v382, %v383
        %v385 = vadd.f32 %v375, 1e-05
        %v386 = vadd.f32 %v384, 1e-05
        %v387 = vrcp.pop %v385
        %v388 = vrcp.pop %v386
        %v389 = vmul.f32 %v385, %v387
        %v390 = vmul.f32 %v386, %v388
        %v391 = vsub.f32 2.0, %v389
        %v392 = vsub.f32 2.0, %v390
        %v393 = vmul.f32 %v387, %v391
        %v394 = vmul.f32 %v388, %v392
        %v395 = vmul.f32 %v356, %v393
        %v396 = vmul.f32 %v358, %v394
        %v397 = vmul.f32 %v360, %v393
        %v398 = vmul.f32 %v362, %v394
        %v399 = vmul.f32 %v364, %v393
        %v400 = vmul.f32 %v366, %v394
        %v401 = vmul.f32 %v395, %v395
        %v402 = vmul.f32 %v396, %v396
        %v403 = vmul.f32 %v397, %v397
        %v404 = vmul.f32 %v398, %v398
        %v405 = vmul.f32 %v399, %v399
        %v406 = vmul.f32 %v400, %v400
        %v407 = vmul.f32 %v310, 1.442695
        %v408 = vpow.pop %v407
        %v409 = vmul.f32 %v311, 1.442695
        %v410 = vpow.pop %v409
        %v411 = vmul.f32 %v312, 1.442695
        %v412 = vpow.pop %v411
        %v413 = vmul.f32 %v313, 1.442695
        %v414 = vpow.pop %v413
        %v415 = vmul.f32 %v314, 1.442695
        %v416 = vpow.pop %v415
        %v417 = vmul.f32 %v315, 1.442695
        %v418 = vpow.pop %v417
        %v419 = vsub.f32 %v408, 1.0
        %v420 = vsub.f32 %v410, 1.0
        %v421 = vsub.f32 %v412, 1.0
        %v422 = vsub.f32 %v414, 1.0
        %v423 = vsub.f32 %v416, 1.0
        %v424 = vsub.f32 %v418, 1.0
        %v425 = vmul.f32 %v401, %v419
        %v426 = vmul.f32 %v402, %v420
        %v427 = vmul.f32 %v403, %v421
        %v428 = vmul.f32 %v404, %v422
        %v429 = vmul.f32 %v405, %v423
        %v430 = vmul.f32 %v406, %v424
        %v431 = vadd.f32 %v425, 0.00101
        %v432 = vadd.f32 %v426, 0.00101
        %v433 = vadd.f32 %v427, 0.00101
        %v434 = vadd.f32 %v428, 0.00101
        %v435 = vadd.f32 %v429, 0.00101
        %v436 = vadd.f32 %v430, 0.00101
        %v437 = vld [vmem:[%s292] sm:$0x3]
        %v438 = vlaneseq
        %v439 = vshrl.u32 %v438, 7
        %v440 = vadd.s32 %v439, 8
        %v441 = vadd.s32 %v439, 16
        %v442 = vlaneseq
        %v443 = vshrl.u32 %v442, 7
        %v444 = vsub.s32 0, %v443
        %v445 = vrot.slane %v437, %v444
        %v446 = vlaneseq
        %v447 = vshrl.u32 %v446, 7
        %v448 = vsub.s32 1, %v447
        %v449 = vrot.slane %v437, %v448
        %vm450 = vcmp.eq.s32.totalorder %v445, %v439
        %vm451 = vcmp.eq.s32.totalorder %v449, %v439
        %vm452 = vcmp.eq.s32.totalorder %v445, %v440
        %vm453 = vcmp.eq.s32.totalorder %v449, %v440
        %vm454 = vcmp.eq.s32.totalorder %v445, %v441
        %vm455 = vcmp.eq.s32.totalorder %v449, %v441
        %v456 = vsel %vm450, 1, 0
        %v457 = vsel %vm451, 1, 0
        %v458 = vsel %vm452, 1, 0
        %v459 = vsel %vm453, 1, 0
        %v460 = vsel %vm454, 1, 0
        %v461 = vsel %vm455, 1, 0
        %v462 = vcvt.s32.f32 %v456
        %v463 = vcvt.s32.f32 %v457
        %v464 = vcvt.s32.f32 %v458
        %v465 = vcvt.s32.f32 %v459
        %v466 = vcvt.s32.f32 %v460
        %v467 = vcvt.s32.f32 %v461
        %v468 = vrcp.pop %v431
        %v469 = vrcp.pop %v432
        %v470 = vrcp.pop %v433
        %v471 = vrcp.pop %v434
        %v472 = vrcp.pop %v435
        %v473 = vrcp.pop %v436
        %v474 = vmul.f32 %v431, %v468
        %v475 = vmul.f32 %v432, %v469
        %v476 = vmul.f32 %v433, %v470
        %v477 = vmul.f32 %v434, %v471
        %v478 = vmul.f32 %v435, %v472
        %v479 = vmul.f32 %v436, %v473
        %v480 = vsub.f32 2.0, %v474
        %v481 = vsub.f32 2.0, %v475
        %v482 = vsub.f32 2.0, %v476
        %v483 = vsub.f32 2.0, %v477
        %v484 = vsub.f32 2.0, %v478
        %v485 = vsub.f32 2.0, %v479
        %v486 = vmul.f32 %v468, %v480
        %v487 = vmul.f32 %v469, %v481
        %v488 = vmul.f32 %v470, %v482
        %v489 = vmul.f32 %v471, %v483
        %v490 = vmul.f32 %v472, %v484
        %v491 = vmul.f32 %v473, %v485
        %v492 = vsub.f32 %v462, %v395
        %v493 = vsub.f32 %v463, %v396
        %v494 = vsub.f32 %v464, %v397
        %v495 = vsub.f32 %v465, %v398
        %v496 = vsub.f32 %v466, %v399
        %v497 = vsub.f32 %v467, %v400
        %v498 = vmul.f32 %v492, %v492
        %v499 = vmul.f32 %v493, %v493
        %v500 = vmul.f32 %v494, %v494
        %v501 = vmul.f32 %v495, %v495
        %v502 = vmul.f32 %v496, %v496
        %v503 = vmul.f32 %v497, %v497
        %v504 = vmul.f32 %v486, %v498
        %v505 = vmul.f32 %v487, %v499
        %v506 = vmul.f32 %v488, %v500
        %v507 = vmul.f32 %v489, %v501
        %v508 = vmul.f32 %v490, %v502
        %v509 = vmul.f32 %v491, %v503
        %v510 = vlog2.pop %v431
        %v511 = vmul.f32 %v510, 0.6931472
        %v512 = vlog2.pop %v432
        %v513 = vmul.f32 %v512, 0.6931472
        %v514 = vlog2.pop %v433
        %v515 = vmul.f32 %v514, 0.6931472
        %v516 = vlog2.pop %v434
        %v517 = vmul.f32 %v516, 0.6931472
        %v518 = vlog2.pop %v435
        %v519 = vmul.f32 %v518, 0.6931472
        %v520 = vlog2.pop %v436
        %v521 = vmul.f32 %v520, 0.6931472
        %v522 = vadd.f32 %v504, %v511
        %v523 = vadd.f32 %v505, %v513
        %v524 = vadd.f32 %v506, %v515
        %v525 = vadd.f32 %v507, %v517
        %v526 = vadd.f32 %v508, %v519
        %v527 = vadd.f32 %v509, %v521
        %v528 = vadd.f32 %v522, %v524
        %v529 = vsel %vm328, %v526, 0.0
        %v530 = vadd.f32 %v528, %v529
        %v531 = vrot.slane %v530, 4
        %v532 = vadd.f32 %v530, %v531
        %v533 = vrot.slane %v532, 2
        %v534 = vadd.f32 %v532, %v533
        %v535 = vrot.slane %v534, 1
        %v536 = vadd.f32 %v534, %v535
        %v537 = vadd.f32 %v523, %v525
        %v538 = vsel %vm328, %v527, 0.0
        %v539 = vadd.f32 %v537, %v538
        %v540 = vrot.slane %v539, 4
        %v541 = vadd.f32 %v539, %v540
        %v542 = vrot.slane %v541, 2
        %v543 = vadd.f32 %v541, %v542
        %v544 = vrot.slane %v543, 1
        %v545 = vadd.f32 %v543, %v544
        %v546 = vld [vmem:[#allocation2] sm:$0x3]
        %v549 = vcombine.low %v536, %v545
        %v551 = vunpack.c.l.s4 1966171168
        %v552 = vunpack.c.0.s8 %v551
        %v553 = vlaneseq
        %v554 = vshrl.u32 %v553, 7
        %v555 = vsub.s32 %v552, %v554
        %v556 = vrot.slane %v549, %v555
        %v558 = vunpack.c.l.s4 1966171168
        %v559 = vunpack.c.0.s8 %v558
        %v560 = vlaneseq
        %v561 = vshrl.u32 %v560, 7
        %v562 = vsub.s32 %v559, %v561
        %v563 = vrot.slane %v556, %v562
        %v565 = vadd.f32 %v546, %v563
        %v566 = vlaneseq
        %vm567 = vcmp.ge.s32.totalorder %v566, 0
        %vm568 = vcmp.lt.s32.totalorder %v566, 256
        %vm569 = vmand %vm567, %vm568
        %570 = vst.msk [vmem:[#allocation2] sm:$0x3] %vm569, %v565
        // Predicated region
        $region37: #{tpu_custom_call.1} parent=31 // pred_check
          %p571 = pneg %p295
        $region38: #{tpu_custom_call.1} parent=31 // pred_check_branch
          %573 = sbr.rel (%p571) target = $region40
        $region39: #{tpu_custom_call.1} parent=31 // pred_region
          %v574 = vld [vmem:[#allocation2] sm:$0x3]
          %v576 = vlaneseq
          %v577 = vshrl.u32 %v576, 7
          %v578 = vsub.s32 0, %v577
          %v579 = vrot.slane %v574, %v578
          %v580 = vlaneseq
          %v581 = vshrl.u32 %v580, 7
          %v582 = vsub.s32 1, %v581
          %v583 = vrot.slane %v574, %v582
          %vm586 = vcmask 1040384
          %v587 = vsel %vm586, %v579, 0.0
          %v588 = vsel %vm586, %v583, 0.0
          %v589 = vadd.f32 %v587, %v588
          %590 = vadd.xlane.f32.xlu0 %v589
          %v591 = vpop.xlane.xlu0 %590
          %v592 = vrot.slane %v591, 4
          %v593 = vadd.f32 %v591, %v592
          %v594 = vrot.slane %v593, 2
          %v595 = vadd.f32 %v593, %v594
          %v596 = vrot.slane %v595, 1
          %v597 = vadd.f32 %v595, %v596
          %s598 = vtos %v597
          %v599 = vstv %s598
          %600 = vst [vmem:[%s259] sm:$0x1] %v599
        $region40: #{tpu_custom_call.1} parent=31 // pred_fallthru
          _
        %s601 = sand.u32 %s136, 1
        %s602 = scalar_lea.sflag [#allocation4], %s601
        %s603 = sand.u32 %s136, 1
        %s604 = scalar_lea.vmem [#allocation3], %s603
        // Predicated region
        $region41: #{tpu_custom_call.1} parent=31 // pred_check
          %p605 = pneg %p146
        $region42: #{tpu_custom_call.1} parent=31 // pred_check_branch
          %607 = sbr.rel (%p605) target = $region44
        $region43: #{tpu_custom_call.1} parent=31 // pred_region
          %s609 = ssub.s32 16, 16
          %610 = vsyncadd %s602, %s609
          %s611 = sadd.s32 %s23, %s22
          %s612 = smul.addr %s611, 16
          %s613 = scalar_lea.hbm %s3, %s612
          %s615 = sshll.u32 %s604, 4
          %s616 = int_to_ptr.vmem [resolvable:$true] %s615
          %618 = dma.vmem_to_hbm [thread:$0]  %s616, 16, %s613, %s602
        $region44: #{tpu_custom_call.1} parent=31 // pred_fallthru
          _
      $region32: #{tpu_custom_call.1} parent=5 // pred_fallthru
        _
      %p619 = scmp.le.s32.totalorder 2, %s12
      // Predicated region
      $region45: #{tpu_custom_call.1} parent=5 // pred_check
        %p620 = pneg %p619
      $region46: #{tpu_custom_call.1} parent=5 // pred_check_branch
        %622 = sbr.rel (%p620) target = $region48
      $region47: #{tpu_custom_call.1} parent=5 // pred_region
        %s623 = ssub.s32 %s12, 2
        // Predicated region
        $region49: #{tpu_custom_call.1} parent=47 // pred_check
          %p624 = pneg %p152
        $region50: #{tpu_custom_call.1} parent=47 // pred_check_branch
          %626 = sbr.rel (%p624) target = $region52
        $region51: #{tpu_custom_call.1} parent=47 // pred_region
          %s627 = sand.u32 %s137, 1
          %s628 = scalar_lea.sflag [#allocation4], %s627
          %s629 = sand.u32 %s137, 1
          %s630 = scalar_lea.vmem [#allocation3], %s629
          %631 = dma.done %s628, 16
        $region52: #{tpu_custom_call.1} parent=47 // pred_fallthru
          _
      $region48: #{tpu_custom_call.1} parent=5 // pred_fallthru
        _
    $region6: #{tpu_custom_call.1} parent=1 // loop_footer
      %s16 = sadd.s32 1, %s12
    $region7: #{tpu_custom_call.1} parent=1 // loop_footer_branch
      %11 = sbr.rel target = $region3
    $region8: #{tpu_custom_call.1} parent=1 // loop_exit
      _
    %632 = vsyncpa [#allocation4], 1
    %s633 = scalar_lea.sflag [#allocation4], 1
    %634 = vsyncpa %s633, 1

</llo_original>
